<compile_context>
chip_gen: v7x
topology: tpu7x:2x2x1
jax: 0.10.0
libtpu: 0.0.40
codegen_flags: <defaults>
</compile_context>

<pallas_src>
import numpy as np
import jax
import jax.numpy as jnp
from jax.experimental import pallas as pl
from jax.experimental.pallas import tpu as pltpu

# ---- small config, consistent with Cycle_Reservoir semantics ---------------
INPUT_SIZE = 4
FEATURES = 24 * INPUT_SIZE          # x is [B, 24*input_size] -> 96
UNITS = 32                          # reservoir units
OUTPUT_SIZE = 16                    # "output_size"
BATCH = 8                           # full f32 sublane occupancy
SEQ_LEN = 8                         # demo sequence length (grid extent T)
LEAKY = 1.0
INPUT_SCALING = 1.0
SPECTRAL_RADIUS = 0.9
SPARSITY = 0.05
CYCLE_WEIGHT = 0.05
JUMP_WEIGHT = 0.5
JUMP_SIZE = 7                       # scaled down from 137 so jumps exist at UNITS=32
CONNECTION_WEIGHT = 0.08

F, U, O = FEATURES, UNITS, OUTPUT_SIZE

# packed, lane-dense output width: [state | out2 | zero-pad] -> multiple of 128
PACK_WIDTH = ((U + O + 127) // 128) * 128

# Row offsets inside the packed readout-weight slab `w_ro` (all multiples of 8
# so every in-kernel static slice starts on a sublane boundary).
OFF_WOX = 0                 # weight_out.T, x rows          [F]
OFF_WOS = OFF_WOX + F       # weight_out.T, state rows      [U]   = 96
OFF_W2X = OFF_WOS + U       # weight2.T,    x rows          [F]   = 128
OFF_W2X2 = OFF_W2X + F      # weight2.T,    x^2 rows        [F]   = 224
OFF_W2S = OFF_W2X2 + F      # weight2.T,    state rows      [U]   = 320
OFF_W2S2 = OFF_W2S + U      # weight2.T,    state^2 rows    [U]   = 352
OFF_W2R = OFF_W2S2 + U      # weight2.T,    ro rows         [O]   = 384
OFF_W2R2 = OFF_W2R + O      # weight2.T,    ro^2 rows       [O]   = 400
OFF_BOUT = OFF_W2R2 + O     # weight_out bias (1 row, padded to 8) = 416
OFF_B2 = OFF_BOUT + 8       # weight2 bias    (1 row, padded to 8) = 424
W_RO_ROWS = OFF_B2 + 8      # total packed K rows                  = 432


# ---------------------------- Pallas kernel ---------------------------------
def reservoir_kernel(x_ref, h0_ref, w_state_ref, w_ro_ref, out_ref, h_scr):
    t = pl.program_id(0)

    # Seed the carried reservoir state once.
    @pl.when(t == 0)
    def _():
        h_scr[...] = h0_ref[...]

    x = x_ref[0]                       # [B, F]  (per-step block)
    h = h_scr[...]                     # [B, U]  (carried across grid steps)

    # Resident weight views (static, sublane-aligned slices).
    K = w_state_ref[0:F, :]            # [F, U] input kernel
    R = w_state_ref[F:F + U, :]        # [U, U] recurrent kernel

    def dot(a, b):
        return jnp.dot(a, b, preferred_element_type=jnp.float32)

    # ---- x-only partial products: independent of h / state / ro, so they
    # overlap with the recurrent-critical chain instead of serializing it.
    x2 = x * x
    in_part = dot(x, K)                                           # [B, U]
    px_ro = dot(x, w_ro_ref[OFF_WOX:OFF_WOX + F, :])              # [B, O]
    px_2 = (dot(x, w_ro_ref[OFF_W2X:OFF_W2X + F, :])
            + dot(x2, w_ro_ref[OFF_W2X2:OFF_W2X2 + F, :]))        # [B, O]

    # ---- recurrent critical path: h -> state -> ro -> out2
    state = jnp.tanh(in_part + dot(h, R))                         # [B, U]
    if LEAKY == 1.0:                   # trace-time fold of the dead term
        hmix = state
    else:
        hmix = h * (1.0 - LEAKY) + state

    b_out = w_ro_ref[OFF_BOUT:OFF_BOUT + 1, :]                    # [1, O]
    ro = jnp.tanh(px_ro + dot(hmix, w_ro_ref[OFF_WOS:OFF_WOS + U, :]) + b_out)

    b2 = w_ro_ref[OFF_B2:OFF_B2 + 1, :]                           # [1, O]
    out2 = jnp.tanh(
        px_2
        + dot(state, w_ro_ref[OFF_W2S:OFF_W2S + U, :])
        + dot(state * state, w_ro_ref[OFF_W2S2:OFF_W2S2 + U, :])
        + dot(ro, w_ro_ref[OFF_W2R:OFF_W2R + O, :])
        + dot(ro * ro, w_ro_ref[OFF_W2R2:OFF_W2R2 + O, :])
        + b2)

    # Carry reservoir state to the next grid step.
    h_scr[...] = state

    # Single lane-dense packed store per step: [state | out2 | zero-pad].
    pad = jnp.zeros((state.shape[0], PACK_WIDTH - U - O), jnp.float32)
    out_ref[0] = jnp.concatenate([state, out2, pad], axis=1)


# ------------------------------- wrappers ------------------------------------
def reservoir_forward_sequence(x_seq, h0, params):
    """Run T recurrent steps inside one pallas_call.

    x_seq: [T, B, F] float32, h0: [B, U] float32.
    Returns (final_state [B, U], outputs [T, B, O]).
    """
    T, B, Fdim = x_seq.shape

    packed = pl.pallas_call(
        reservoir_kernel,
        out_shape=jax.ShapeDtypeStruct((T, B, PACK_WIDTH), jnp.float32),
        grid_spec=pltpu.PrefetchScalarGridSpec(
            num_scalar_prefetch=0,
            grid=(T,),
            in_specs=[
                # per-step x block
                pl.BlockSpec((1, B, Fdim), lambda t: (t, 0, 0)),
                # resident blocks (constant index map -> DMA'd once)
                pl.BlockSpec((B, U), lambda t: (0, 0)),
                pl.BlockSpec((F + U, U), lambda t: (0, 0)),
                pl.BlockSpec((W_RO_ROWS, O), lambda t: (0, 0)),
            ],
            out_specs=pl.BlockSpec((1, B, PACK_WIDTH), lambda t: (t, 0, 0)),
            scratch_shapes=[pltpu.VMEM((B, U), jnp.float32)],
        ),
        compiler_params=pltpu.CompilerParams(
            dimension_semantics=("arbitrary",)),   # recurrence: sequential in t
    )(x_seq, h0, params["w_state"], params["w_ro"])

    states = packed[:, :, :U]            # [T, B, U]
    outs = packed[:, :, U:U + O]         # [T, B, O]
    return states[-1], outs


def reservoir_forward(x, h_prev, params):
    """Single-step API matching torch ReservoirLayer.forward:
    returns (new reservoir state [B, U], hs [B, 1, O])."""
    h_last, outs = reservoir_forward_sequence(x[None], h_prev, params)
    hs = outs[0][:, None, :]             # torch.stack([output], dim=1)
    return h_last, hs


# --------------------- deterministic parameter init --------------------------
def make_params(seed=0):
    rng = np.random.default_rng(seed)

    # kernel ~ init_weight(24*input_size, units, sparsity*input_scaling)
    mask = rng.random((F, U)) < SPARSITY * INPUT_SCALING
    kernel = (rng.random((F, U)) * mask).astype(np.float64)

    # recurrent_kernel ~ init_reservoir + spectral_norm_scaling (leaky == 1 branch)
    W = np.full((U, U), CONNECTION_WEIGHT, dtype=np.float64)
    W[0, U - 1] = CYCLE_WEIGHT
    for i in range(U - 1):
        W[i + 1, i] = CYCLE_WEIGHT
    j = 0
    while j + JUMP_SIZE <= U:
        if j + JUMP_SIZE == U:
            W[j, 0] = JUMP_WEIGHT
            W[0, j] = JUMP_WEIGHT
        else:
            W[j, j + JUMP_SIZE] = JUMP_WEIGHT
            W[j + JUMP_SIZE, j] = JUMP_WEIGHT
        j += JUMP_SIZE
    sign = np.where(rng.random((U, U)) < 0.5, -1.0, 1.0)
    W = W * sign
    W[int(rng.integers(0, U)), int(rng.integers(0, U))] = 0.0
    rho = float(np.max(np.abs(np.linalg.eigvals(W))))
    recurrent = W * (SPECTRAL_RADIUS / rho)

    # weight_out: nn.Linear(F + U, O)   y = z @ W.T + b
    lim1 = 1.0 / np.sqrt(F + U)
    Wout = rng.uniform(-lim1, lim1, (O, F + U))
    bout = rng.uniform(-lim1, lim1, (O,))

    # weight2: nn.Linear(2*(F+U+O), O)
    D2 = 2 * (F + U + O)
    lim2 = 1.0 / np.sqrt(D2)
    W2 = rng.uniform(-lim2, lim2, (O, D2))
    b2 = rng.uniform(-lim2, lim2, (O,))

    WoutT = Wout.T                       # [F+U, O]
    W2T = W2.T                           # [2*(F+U+O), O]

    # --- packed device slabs (DMA'd once per sequence, resident in VMEM) ----
    # state-update weights: [[kernel]; [recurrent_kernel]]  -> [F+U, U]
    w_state = np.concatenate([kernel, recurrent], axis=0)

    # readout weights + biases packed along K at 8-aligned row offsets.
    # torch weight2 input layout: [x, state, ro, x^2, state^2, ro^2]
    w_ro = np.zeros((W_RO_ROWS, O), dtype=np.float64)
    w_ro[OFF_WOX:OFF_WOX + F] = WoutT[:F]
    w_ro[OFF_WOS:OFF_WOS + U] = WoutT[F:]
    w_ro[OFF_W2X:OFF_W2X + F] = W2T[0:F]
    w_ro[OFF_W2X2:OFF_W2X2 + F] = W2T[F + U + O:F + U + O + F]
    w_ro[OFF_W2S:OFF_W2S + U] = W2T[F:F + U]
    w_ro[OFF_W2S2:OFF_W2S2 + U] = W2T[F + U + O + F:F + U + O + F + U]
    w_ro[OFF_W2R:OFF_W2R + O] = W2T[F + U:F + U + O]
    w_ro[OFF_W2R2:OFF_W2R2 + O] = W2T[F + U + O + F + U:]
    w_ro[OFF_BOUT] = bout
    w_ro[OFF_B2] = b2

    params = dict(
        w_state=jnp.asarray(np.ascontiguousarray(w_state), dtype=jnp.float32),
        w_ro=jnp.asarray(np.ascontiguousarray(w_ro), dtype=jnp.float32),
    )
    raw = dict(
        kernel=jnp.asarray(kernel, jnp.float32),
        recurrent=jnp.asarray(recurrent, jnp.float32),
        WoutT=jnp.asarray(WoutT, jnp.float32),
        b_out=jnp.asarray(bout, jnp.float32)[None, :],
        W2T=jnp.asarray(W2T, jnp.float32),
        b2=jnp.asarray(b2, jnp.float32)[None, :],
    )
    return params, raw


# ------------------------ pure-JAX reference (check) --------------------------
def reference_step(x, h, raw):
    hp = jax.lax.Precision.HIGHEST
    input_part = jnp.dot(x, raw["kernel"], precision=hp)
    state = jnp.tanh(jnp.dot(h, raw["recurrent"], precision=hp) + input_part)
    out = jnp.concatenate([x, h * (1.0 - LEAKY) + state], axis=1)
    ro = jnp.tanh(jnp.dot(out, raw["WoutT"], precision=hp) + raw["b_out"])
    ro1 = jnp.concatenate([x, state, ro, x ** 2, state ** 2, ro ** 2], axis=1)
    out2 = jnp.tanh(jnp.dot(ro1, raw["W2T"], precision=hp) + raw["b2"])
    return state, out2


if __name__ == "__main__":
    key = jax.random.PRNGKey(0)
    kx, kh = jax.random.split(key)
    x_seq = jax.random.normal(kx, (SEQ_LEN, BATCH, FEATURES), dtype=jnp.float32)
    # Non-zero reservoir state (as if set via set_reservoir_state) so the
    # recurrent h @ R path is actually exercised.
    h0 = 0.1 * jax.random.normal(kh, (BATCH, UNITS), dtype=jnp.float32)

    params, raw = make_params(0)

    # --- sequence path: T recurrent steps inside one pallas_call -------------
    h_last, outs = reservoir_forward_sequence(x_seq, h0, params)
    jax.block_until_ready((h_last, outs))

    h_ref = h0
    ref_outs = []
    for t in range(SEQ_LEN):
        h_ref, o = reference_step(x_seq[t], h_ref, raw)
        ref_outs.append(o)
    ref_outs = jnp.stack(ref_outs, axis=0)

    np.testing.assert_allclose(np.asarray(outs), np.asarray(ref_outs),
                               rtol=1e-4, atol=1e-4)
    np.testing.assert_allclose(np.asarray(h_last), np.asarray(h_ref),
                               rtol=1e-4, atol=1e-4)

    # --- single-step path matching torch ReservoirLayer.forward --------------
    state1, hs1 = reservoir_forward(x_seq[0], h0, params)
    jax.block_until_ready((state1, hs1))
    ref_s1, ref_o1 = reference_step(x_seq[0], h0, raw)
    np.testing.assert_allclose(np.asarray(state1), np.asarray(ref_s1),
                               rtol=1e-4, atol=1e-4)
    np.testing.assert_allclose(np.asarray(hs1), np.asarray(ref_o1[:, None, :]),
                               rtol=1e-4, atol=1e-4)
    assert hs1.shape == (BATCH, 1, OUTPUT_SIZE)
    assert state1.shape == (BATCH, UNITS)

    print("KERNEL_OK")
</pallas_src>

<mosaic_0001>
module attributes {stable_mosaic.version = 11 : i64} {
  func.func @reservoir_kernel(%arg0: i32, %arg1: memref<1x8x96xf32, #tpu.memory_space<vmem>>, %arg2: memref<8x32xf32, #tpu.memory_space<vmem>>, %arg3: memref<128x32xf32, #tpu.memory_space<vmem>>, %arg4: memref<432x16xf32, #tpu.memory_space<vmem>>, %arg5: memref<1x8x128xf32, #tpu.memory_space<vmem>>, %arg6: memref<8x32xf32, #tpu.memory_space<vmem>>) attributes {dimension_semantics = [#tpu.dimension_semantics<arbitrary>], iteration_bounds = array<i64: 8>, scalar_prefetch = 0 : i64, scratch_operands = 1 : i64, tpu.core_type = #tpu.core_type<tc>, window_params = [{transform_indices = @transform_0, window_bounds = array<i64: 1, 8, 96>}, {pipeline_mode = #tpu.pipeline_mode<synchronous>, transform_indices = @transform_1, window_bounds = array<i64: 8, 32>}, {pipeline_mode = #tpu.pipeline_mode<synchronous>, transform_indices = @transform_2, window_bounds = array<i64: 128, 32>}, {pipeline_mode = #tpu.pipeline_mode<synchronous>, transform_indices = @transform_3, window_bounds = array<i64: 432, 16>}, {transform_indices = @transform_4, window_bounds = array<i64: 1, 8, 128>}]} {
    %c0_i32 = arith.constant 0 : i32
    %0 = arith.cmpi eq, %arg0, %c0_i32 : i32
    %1 = arith.extui %0 : i1 to i32
    %c0_i32_0 = arith.constant 0 : i32
    %2 = arith.cmpi ne, %1, %c0_i32_0 : i32
    scf.if %2 {
      %c0_35 = arith.constant 0 : index
      %c0_36 = arith.constant 0 : index
      %51 = vector.load %arg2[%c0_35, %c0_36] : memref<8x32xf32, #tpu.memory_space<vmem>>, vector<8x32xf32>
      %c0_37 = arith.constant 0 : index
      %c0_38 = arith.constant 0 : index
      %52 = vector.load %arg6[%c0_37, %c0_38] : memref<8x32xf32, #tpu.memory_space<vmem>>, vector<8x32xf32>
      tpu.vector_store %arg6[%c0_37, %c0_38], %51 {strides = array<i32>} : memref<8x32xf32, #tpu.memory_space<vmem>>, vector<8x32xf32>,
    } else {
    }
    %c0 = arith.constant 0 : index
    %c0_1 = arith.constant 0 : index
    %c0_2 = arith.constant 0 : index
    %3 = vector.load %arg1[%c0, %c0_1, %c0_2] : memref<1x8x96xf32, #tpu.memory_space<vmem>>, vector<1x8x96xf32>
    %4 = vector.shape_cast %3 : vector<1x8x96xf32> to vector<8x96xf32>
    %c0_3 = arith.constant 0 : index
    %c0_4 = arith.constant 0 : index
    %5 = vector.load %arg6[%c0_3, %c0_4] : memref<8x32xf32, #tpu.memory_space<vmem>>, vector<8x32xf32>
    %c0_5 = arith.constant 0 : index
    %c0_6 = arith.constant 0 : index
    %6 = vector.load %arg3[%c0_5, %c0_6] : memref<128x32xf32, #tpu.memory_space<vmem>>, vector<96x32xf32>
    %c96 = arith.constant 96 : index
    %c0_7 = arith.constant 0 : index
    %7 = vector.load %arg3[%c96, %c0_7] : memref<128x32xf32, #tpu.memory_space<vmem>>, vector<32x32xf32>
    %8 = arith.mulf %4, %4 : vector<8x96xf32>
    %cst = arith.constant dense<0.000000e+00> : vector<8x32xf32>
    %9 = tpu.matmul %4, %6, %cst {dimension_numbers = #tpu.dot_dimension_numbers<[1], [0], [0], [1], [0, 0, 1, 1], [], []>} : vector<8x96xf32>, vector<96x32xf32>, vector<8x32xf32> -> vector<8x32xf32>
    %c0_8 = arith.constant 0 : index
    %c0_9 = arith.constant 0 : index
    %10 = vector.load %arg4[%c0_8, %c0_9] : memref<432x16xf32, #tpu.memory_space<vmem>>, vector<96x16xf32>
    %cst_10 = arith.constant dense<0.000000e+00> : vector<8x16xf32>
    %11 = tpu.matmul %4, %10, %cst_10 {dimension_numbers = #tpu.dot_dimension_numbers<[1], [0], [0], [1], [0, 0, 1, 1], [], []>} : vector<8x96xf32>, vector<96x16xf32>, vector<8x16xf32> -> vector<8x16xf32>
    %c128 = arith.constant 128 : index
    %c0_11 = arith.constant 0 : index
    %12 = vector.load %arg4[%c128, %c0_11] : memref<432x16xf32, #tpu.memory_space<vmem>>, vector<96x16xf32>
    %cst_12 = arith.constant dense<0.000000e+00> : vector<8x16xf32>
    %13 = tpu.matmul %4, %12, %cst_12 {dimension_numbers = #tpu.dot_dimension_numbers<[1], [0], [0], [1], [0, 0, 1, 1], [], []>} : vector<8x96xf32>, vector<96x16xf32>, vector<8x16xf32> -> vector<8x16xf32>
    %c224 = arith.constant 224 : index
    %c0_13 = arith.constant 0 : index
    %14 = vector.load %arg4[%c224, %c0_13] : memref<432x16xf32, #tpu.memory_space<vmem>>, vector<96x16xf32>
    %cst_14 = arith.constant dense<0.000000e+00> : vector<8x16xf32>
    %15 = tpu.matmul %8, %14, %cst_14 {dimension_numbers = #tpu.dot_dimension_numbers<[1], [0], [0], [1], [0, 0, 1, 1], [], []>} : vector<8x96xf32>, vector<96x16xf32>, vector<8x16xf32> -> vector<8x16xf32>
    %16 = arith.addf %13, %15 : vector<8x16xf32>
    %cst_15 = arith.constant dense<0.000000e+00> : vector<8x32xf32>
    %17 = tpu.matmul %5, %7, %cst_15 {dimension_numbers = #tpu.dot_dimension_numbers<[1], [0], [0], [1], [0, 0, 1, 1], [], []>} : vector<8x32xf32>, vector<32x32xf32>, vector<8x32xf32> -> vector<8x32xf32>
    %18 = arith.addf %9, %17 : vector<8x32xf32>
    %19 = math.tanh %18 : vector<8x32xf32>
    %c416 = arith.constant 416 : index
    %c0_16 = arith.constant 0 : index
    %20 = vector.load %arg4[%c416, %c0_16] : memref<432x16xf32, #tpu.memory_space<vmem>>, vector<1x16xf32>
    %c96_17 = arith.constant 96 : index
    %c0_18 = arith.constant 0 : index
    %21 = vector.load %arg4[%c96_17, %c0_18] : memref<432x16xf32, #tpu.memory_space<vmem>>, vector<32x16xf32>
    %cst_19 = arith.constant dense<0.000000e+00> : vector<8x16xf32>
    %22 = tpu.matmul %19, %21, %cst_19 {dimension_numbers = #tpu.dot_dimension_numbers<[1], [0], [0], [1], [0, 0, 1, 1], [], []>} : vector<8x32xf32>, vector<32x16xf32>, vector<8x16xf32> -> vector<8x16xf32>
    %23 = arith.addf %11, %22 : vector<8x16xf32>
    %24 = vector.broadcast %20 : vector<1x16xf32> to vector<8x16xf32>
    %25 = arith.addf %23, %24 : vector<8x16xf32>
    %26 = math.tanh %25 : vector<8x16xf32>
    %c424 = arith.constant 424 : index
    %c0_20 = arith.constant 0 : index
    %27 = vector.load %arg4[%c424, %c0_20] : memref<432x16xf32, #tpu.memory_space<vmem>>, vector<1x16xf32>
    %c320 = arith.constant 320 : index
    %c0_21 = arith.constant 0 : index
    %28 = vector.load %arg4[%c320, %c0_21] : memref<432x16xf32, #tpu.memory_space<vmem>>, vector<32x16xf32>
    %cst_22 = arith.constant dense<0.000000e+00> : vector<8x16xf32>
    %29 = tpu.matmul %19, %28, %cst_22 {dimension_numbers = #tpu.dot_dimension_numbers<[1], [0], [0], [1], [0, 0, 1, 1], [], []>} : vector<8x32xf32>, vector<32x16xf32>, vector<8x16xf32> -> vector<8x16xf32>
    %30 = arith.addf %16, %29 : vector<8x16xf32>
    %31 = arith.mulf %19, %19 : vector<8x32xf32>
    %c352 = arith.constant 352 : index
    %c0_23 = arith.constant 0 : index
    %32 = vector.load %arg4[%c352, %c0_23] : memref<432x16xf32, #tpu.memory_space<vmem>>, vector<32x16xf32>
    %cst_24 = arith.constant dense<0.000000e+00> : vector<8x16xf32>
    %33 = tpu.matmul %31, %32, %cst_24 {dimension_numbers = #tpu.dot_dimension_numbers<[1], [0], [0], [1], [0, 0, 1, 1], [], []>} : vector<8x32xf32>, vector<32x16xf32>, vector<8x16xf32> -> vector<8x16xf32>
    %34 = arith.addf %30, %33 : vector<8x16xf32>
    %c384 = arith.constant 384 : index
    %c0_25 = arith.constant 0 : index
    %35 = vector.load %arg4[%c384, %c0_25] : memref<432x16xf32, #tpu.memory_space<vmem>>, vector<16x16xf32>
    %cst_26 = arith.constant dense<0.000000e+00> : vector<8x16xf32>
    %36 = tpu.matmul %26, %35, %cst_26 {dimension_numbers = #tpu.dot_dimension_numbers<[1], [0], [0], [1], [0, 0, 1, 1], [], []>} : vector<8x16xf32>, vector<16x16xf32>, vector<8x16xf32> -> vector<8x16xf32>
    %37 = arith.addf %34, %36 : vector<8x16xf32>
    %38 = arith.mulf %26, %26 : vector<8x16xf32>
    %c400 = arith.constant 400 : index
    %c0_27 = arith.constant 0 : index
    %39 = vector.load %arg4[%c400, %c0_27] : memref<432x16xf32, #tpu.memory_space<vmem>>, vector<16x16xf32>
    %cst_28 = arith.constant dense<0.000000e+00> : vector<8x16xf32>
    %40 = tpu.matmul %38, %39, %cst_28 {dimension_numbers = #tpu.dot_dimension_numbers<[1], [0], [0], [1], [0, 0, 1, 1], [], []>} : vector<8x16xf32>, vector<16x16xf32>, vector<8x16xf32> -> vector<8x16xf32>
    %41 = arith.addf %37, %40 : vector<8x16xf32>
    %42 = vector.broadcast %27 : vector<1x16xf32> to vector<8x16xf32>
    %43 = arith.addf %41, %42 : vector<8x16xf32>
    %44 = math.tanh %43 : vector<8x16xf32>
    %c0_29 = arith.constant 0 : index
    %c0_30 = arith.constant 0 : index
    %45 = vector.load %arg6[%c0_29, %c0_30] : memref<8x32xf32, #tpu.memory_space<vmem>>, vector<8x32xf32>
    tpu.vector_store %arg6[%c0_29, %c0_30], %19 {strides = array<i32>} : memref<8x32xf32, #tpu.memory_space<vmem>>, vector<8x32xf32>,
    %cst_31 = arith.constant 0.000000e+00 : f32
    %46 = vector.broadcast %cst_31 : f32 to vector<8x80xf32>
    %47 = tpu.concatenate %19, %44, %46 in 1 : vector<8x32xf32>, vector<8x16xf32>, vector<8x80xf32> -> vector<8x128xf32>
    %c0_32 = arith.constant 0 : index
    %c0_33 = arith.constant 0 : index
    %c0_34 = arith.constant 0 : index
    %48 = vector.load %arg5[%c0_32, %c0_33, %c0_34] : memref<1x8x128xf32, #tpu.memory_space<vmem>>, vector<1x8x128xf32>
    %49 = vector.shape_cast %48 : vector<1x8x128xf32> to vector<8x128xf32>
    %50 = vector.shape_cast %47 : vector<8x128xf32> to vector<1x8x128xf32>
    tpu.vector_store %arg5[%c0_32, %c0_33, %c0_34], %50 {strides = array<i32>} : memref<1x8x128xf32, #tpu.memory_space<vmem>>, vector<1x8x128xf32>,
    return
  }
  func.func @transform_0(%arg0: i32) -> (i32, i32, i32) {
    %c0_i32 = arith.constant 0 : i32
    %c0_i32_0 = arith.constant 0 : i32
    %c0_i32_1 = arith.constant 0 : i32
    return %arg0, %c0_i32, %c0_i32_0 : i32, i32, i32
  }
  func.func @transform_1(%arg0: i32) -> (i32, i32) {
    %c0_i32 = arith.constant 0 : i32
    %c0_i32_0 = arith.constant 0 : i32
    %c0_i32_1 = arith.constant 0 : i32
    return %c0_i32, %c0_i32_0 : i32, i32
  }
  func.func @transform_2(%arg0: i32) -> (i32, i32) {
    %c0_i32 = arith.constant 0 : i32
    %c0_i32_0 = arith.constant 0 : i32
    %c0_i32_1 = arith.constant 0 : i32
    return %c0_i32, %c0_i32_0 : i32, i32
  }
  func.func @transform_3(%arg0: i32) -> (i32, i32) {
    %c0_i32 = arith.constant 0 : i32
    %c0_i32_0 = arith.constant 0 : i32
    %c0_i32_1 = arith.constant 0 : i32
    return %c0_i32, %c0_i32_0 : i32, i32
  }
  func.func @transform_4(%arg0: i32) -> (i32, i32, i32) {
    %c0_i32 = arith.constant 0 : i32
    %c0_i32_0 = arith.constant 0 : i32
    %c0_i32_1 = arith.constant 0 : i32
    return %arg0, %c0_i32, %c0_i32_0 : i32, i32, i32
  }
}

</mosaic_0001>

<llo_original>
// kernel: tpu_custom_call.1
$region0: #{tpu_custom_call.1}
  #allocation0 [shape = 'u32[]', space=smem, size = 0x4, offset = 0x4, fixed_abs, tag = 'smem constant byte address 0x4 - core index']
  #allocation1 [shape = 'u32[144,128]{1,0:T(1,128)}', space=vmem, size = 0x12000, scoped, tag = 'internal scratch']
  #allocation2 [shape = 'f32[8,32]{1,0:T(8,128)}', space=vmem, size = 0x1000, scoped, tag = 'scratch operand']
  %s0 = inlined_call_operand.vmem [shape: f32[8,8,96], index: 0, kind: input, shape index: {}]
  %s1 = inlined_call_operand.vmem [shape: f32[8,32], index: 1, kind: input, shape index: {}]
  %s2 = inlined_call_operand.vmem [shape: f32[128,32], index: 2, kind: input, shape index: {}]
  %s3 = inlined_call_operand.vmem [shape: f32[432,16], index: 3, kind: input, shape index: {}]
  %s4 = inlined_call_operand.hbm [shape: f32[8,8,128], index: 4, kind: output, shape index: {}]
  %s5 = sld [smem:[#allocation0]]
  $region53: #{tpu_custom_call.1} parent=0
    _
  %s7 = ssub.s32 1, %s5
  %s8 = scalar_select 0, %s7, %s5
  $region1: #{tpu_custom_call.1} parent=0
    #allocation3 [shape = 'u8[8192]{0}', space=vmem, size = 0x2000, scoped, tag = 'output window, operand 0']
    #allocation4 [shape = 's32[2]{0}', space=sflag, size = 0x8, scoped, tag = 'scoped memory for tpu_custom_call.1']
    %9 = vsyncpa [#allocation4], 0
    %s10 = scalar_lea.sflag [#allocation4], 1
    %11 = vsyncpa %s10, 0
    loop: start=0, step=1, limit=10
    $region2: #{tpu_custom_call.1} parent=1 // loop_pre_header
      _
    $region3: #{tpu_custom_call.1} parent=1 // loop_header
      %s13 = sphi 0, %s17
      %p14 = scmp.ge.s32.totalorder %s13, 10
      %s23 = sphi 0, %s25
      %s26 = sphi 0, %s23
      %s27 = sphi 0, %s26
      %s43 = sphi 0, %s27
      %s47 = sphi 0, %s47
      %s49 = sphi 0, %s47
      %s50 = sphi 0, %s49
      %s64 = sphi 0, %s50
      %s68 = sphi 0, %s68
      %s70 = sphi 0, %s68
      %s71 = sphi 0, %s70
      %s85 = sphi 0, %s71
      %s89 = sphi 0, %s89
      %s91 = sphi 0, %s89
      %s92 = sphi 0, %s91
      %s106 = sphi 0, %s92
      %s112 = sphi 0, %s114
      %s115 = sphi 0, %s112
      %s116 = sphi 0, %s115
      %s132 = sphi 0, %s116
    $region4: #{tpu_custom_call.1} parent=1 // loop_header_branch
      %16 = sbr.rel (%p14) target = $region8
    $region5: #{tpu_custom_call.1} parent=1 // loop_body
      %s18 = ssub.s32 %s13, 1
      %s19 = ssub.s32 %s13, 2
      %s20 = sadd.s32 %s13, 1
      %s21 = ssub.s32 %s13, %s20
      %p22 = scmp.eq.s32.totalorder %s21, 0
      %s24 = sadd.s32 %s23, 1
      %s25 = scalar_select %p22, %s23, %s24
      %p28 = pneg %p22
      %p29 = scmp.eq.s32.totalorder %s13, 7
      %p30 = por %p28, %p29
      %p31 = scmp.ne.s32.totalorder %s23, %s26
      %p32 = scmp.eq.s32.totalorder %s13, 0
      %p33 = por %p31, %p32
      %p34 = scmp.ne.s32.totalorder %s23, %s26
      %p35 = scmp.eq.s32.totalorder %s18, 7
      %p36 = por %p34, %p35
      %p37 = scmp.ne.s32.totalorder %s26, %s27
      %p38 = scmp.eq.s32.totalorder %s18, 0
      %p39 = por %p37, %p38
      %p40 = scmp.ne.s32.totalorder %s26, %s27
      %p41 = scmp.eq.s32.totalorder %s19, 7
      %p42 = por %p40, %p41
      %p44 = scmp.ne.s32.totalorder %s27, %s43
      %p45 = scmp.eq.s32.totalorder %s19, 0
      %p46 = por %p44, %p45
      %s48 = sadd.s32 %s47, 1
      %p51 = scmp.eq.s32.totalorder %s13, 7
      %p52 = scmp.ne.s32.totalorder %s47, %s49
      %p53 = scmp.eq.s32.totalorder %s13, 0
      %p54 = por %p52, %p53
      %p55 = scmp.ne.s32.totalorder %s47, %s49
      %p56 = scmp.eq.s32.totalorder %s18, 7
      %p57 = por %p55, %p56
      %p58 = scmp.ne.s32.totalorder %s49, %s50
      %p59 = scmp.eq.s32.totalorder %s18, 0
      %p60 = por %p58, %p59
      %p61 = scmp.ne.s32.totalorder %s49, %s50
      %p62 = scmp.eq.s32.totalorder %s19, 7
      %p63 = por %p61, %p62
      %p65 = scmp.ne.s32.totalorder %s50, %s64
      %p66 = scmp.eq.s32.totalorder %s19, 0
      %p67 = por %p65, %p66
      %s69 = sadd.s32 %s68, 1
      %p72 = scmp.eq.s32.totalorder %s13, 7
      %p73 = scmp.ne.s32.totalorder %s68, %s70
      %p74 = scmp.eq.s32.totalorder %s13, 0
      %p75 = por %p73, %p74
      %p76 = scmp.ne.s32.totalorder %s68, %s70
      %p77 = scmp.eq.s32.totalorder %s18, 7
      %p78 = por %p76, %p77
      %p79 = scmp.ne.s32.totalorder %s70, %s71
      %p80 = scmp.eq.s32.totalorder %s18, 0
      %p81 = por %p79, %p80
      %p82 = scmp.ne.s32.totalorder %s70, %s71
      %p83 = scmp.eq.s32.totalorder %s19, 7
      %p84 = por %p82, %p83
      %p86 = scmp.ne.s32.totalorder %s71, %s85
      %p87 = scmp.eq.s32.totalorder %s19, 0
      %p88 = por %p86, %p87
      %s90 = sadd.s32 %s89, 1
      %p93 = scmp.eq.s32.totalorder %s13, 7
      %p94 = scmp.ne.s32.totalorder %s89, %s91
      %p95 = scmp.eq.s32.totalorder %s13, 0
      %p96 = por %p94, %p95
      %p97 = scmp.ne.s32.totalorder %s89, %s91
      %p98 = scmp.eq.s32.totalorder %s18, 7
      %p99 = por %p97, %p98
      %p100 = scmp.ne.s32.totalorder %s91, %s92
      %p101 = scmp.eq.s32.totalorder %s18, 0
      %p102 = por %p100, %p101
      %p103 = scmp.ne.s32.totalorder %s91, %s92
      %p104 = scmp.eq.s32.totalorder %s19, 7
      %p105 = por %p103, %p104
      %p107 = scmp.ne.s32.totalorder %s92, %s106
      %p108 = scmp.eq.s32.totalorder %s19, 0
      %p109 = por %p107, %p108
      %s110 = ssub.s32 %s13, %s20
      %p111 = scmp.eq.s32.totalorder %s110, 0
      %s113 = sadd.s32 %s112, 1
      %s114 = scalar_select %p111, %s112, %s113
      %p117 = pneg %p111
      %p118 = scmp.eq.s32.totalorder %s13, 7
      %p119 = por %p117, %p118
      %p120 = scmp.ne.s32.totalorder %s112, %s115
      %p121 = scmp.eq.s32.totalorder %s13, 0
      %p122 = por %p120, %p121
      %p123 = scmp.ne.s32.totalorder %s112, %s115
      %p124 = scmp.eq.s32.totalorder %s18, 7
      %p125 = por %p123, %p124
      %p126 = scmp.ne.s32.totalorder %s115, %s116
      %p127 = scmp.eq.s32.totalorder %s18, 0
      %p128 = por %p126, %p127
      %p129 = scmp.ne.s32.totalorder %s115, %s116
      %p130 = scmp.eq.s32.totalorder %s19, 7
      %p131 = por %p129, %p130
      %p133 = scmp.ne.s32.totalorder %s116, %s132
      %p134 = scmp.eq.s32.totalorder %s19, 0
      %p135 = por %p133, %p134
      %p136 = scmp.le.s32.totalorder 1, %s13
      %p137 = scmp.lt.s32.totalorder %s13, 9
      %p138 = pnand %p136, %p137
      %p139 = pneg %p138
      // Predicated region
      $region9: #{tpu_custom_call.1} parent=5 // pred_check
        _
      $region10: #{tpu_custom_call.1} parent=5 // pred_check_branch
        %141 = sbr.rel (%p138) target = $region12
      $region11: #{tpu_custom_call.1} parent=5 // pred_region
        %s142 = ssub.s32 %s13, 1
        // Predicated region
        $region13: #{tpu_custom_call.1} parent=11 // pred_check
          %p143 = pneg %p60
        $region14: #{tpu_custom_call.1} parent=11 // pred_check_branch
          %145 = sbr.rel (%p143) target = $region16
        $region15: #{tpu_custom_call.1} parent=11 // pred_region
          _
        $region16: #{tpu_custom_call.1} parent=11 // pred_fallthru
          _
        // Predicated region
        $region17: #{tpu_custom_call.1} parent=11 // pred_check
          %p146 = pneg %p81
        $region18: #{tpu_custom_call.1} parent=11 // pred_check_branch
          %148 = sbr.rel (%p146) target = $region20
        $region19: #{tpu_custom_call.1} parent=11 // pred_region
          _
        $region20: #{tpu_custom_call.1} parent=11 // pred_fallthru
          _
        // Predicated region
        $region21: #{tpu_custom_call.1} parent=11 // pred_check
          %p149 = pneg %p102
        $region22: #{tpu_custom_call.1} parent=11 // pred_check_branch
          %151 = sbr.rel (%p149) target = $region24
        $region23: #{tpu_custom_call.1} parent=11 // pred_region
          _
        $region24: #{tpu_custom_call.1} parent=11 // pred_fallthru
          _
      $region12: #{tpu_custom_call.1} parent=5 // pred_fallthru
        _
      %p152 = scmp.lt.s32.totalorder %s13, 8
      // Predicated region
      $region25: #{tpu_custom_call.1} parent=5 // pred_check
        %p153 = pneg %p152
      $region26: #{tpu_custom_call.1} parent=5 // pred_check_branch
        %155 = sbr.rel (%p153) target = $region28
      $region27: #{tpu_custom_call.1} parent=5 // pred_region
        // Predicated region
        $region29: #{tpu_custom_call.1} parent=27 // pred_check
          %p156 = pneg %p33
        $region30: #{tpu_custom_call.1} parent=27 // pred_check_branch
          %158 = sbr.rel (%p156) target = $region32
        $region31: #{tpu_custom_call.1} parent=27 // pred_region
          %p159 = scmp.lt.s32.totalorder %s13, 7
          %s160 = scalar_select %p159, %s13, 7
          %s161 = smul.addr %s160, 8
          %s162 = scalar_lea.vmem %s0, %s161
        $region32: #{tpu_custom_call.1} parent=27 // pred_fallthru
          _
      $region28: #{tpu_custom_call.1} parent=5 // pred_fallthru
        _
      %p163 = scmp.le.s32.totalorder 1, %s13
      %p164 = scmp.lt.s32.totalorder %s13, 9
      %p165 = pnand %p163, %p164
      %p166 = pneg %p165
      // Predicated region
      $region33: #{tpu_custom_call.1} parent=5 // pred_check
        _
      $region34: #{tpu_custom_call.1} parent=5 // pred_check_branch
        %168 = sbr.rel (%p165) target = $region36
      $region35: #{tpu_custom_call.1} parent=5 // pred_region
        %s169 = ssub.s32 %s13, 1
        %p170 = scmp.lt.s32.totalorder %s18, 7
        %s171 = scalar_select %p170, %s18, 7
        %s172 = smul.addr %s171, 8
        %s173 = scalar_lea.vmem %s0, %s172
        %p174 = pneg %p39
        %p175 = pneg %p36
        %p176 = pneg %p60
        %p177 = pneg %p57
        %p178 = pneg %p81
        %p179 = pneg %p78
        %p180 = pneg %p102
        %p181 = pneg %p99
        %p182 = pneg %p128
        %p183 = pneg %p125
        %s184 = sand.u32 %s115, 1
        %s185 = scalar_lea.sflag [#allocation4], %s184
        %s186 = sand.u32 %s115, 1
        %s187 = smul.addr %s186, 8
        %s188 = scalar_lea.vmem [#allocation3], %s187
        %p189 = scmp.lt.s32.totalorder %s18, 7
        %s190 = scalar_select %p189, %s18, 7
        %s191 = smul.addr %s190, 8
        %s192 = scalar_lea.vmem %s0, %s191
        %p193 = scmp.eq.s32.totalorder %s18, 0
        // Predicated region
        $region37: #{tpu_custom_call.1} parent=35 // pred_check
          %p194 = pneg %p193
        $region38: #{tpu_custom_call.1} parent=35 // pred_check_branch
          %196 = sbr.rel (%p194) target = $region40
        $region39: #{tpu_custom_call.1} parent=35 // pred_region
          %v197 = vld [vmem:[%s1] sm:$0xff]
          %vm198 = vcmask 261120
          %199 = vst.msk [vmem:[#allocation2] sm:$0xff] %vm198, %v197
        $region40: #{tpu_custom_call.1} parent=35 // pred_fallthru
          _
        %v200 = vld [vmem:[%s192] sm:$0xff]
        %v201 = vld [vmem:[#allocation2] sm:$0xff]
        %v202 = vld [vmem:[%s2] sm:$0xff]
        %v203 = vld [vmem:[%s2 + $0x8] sm:$0xff]
        %v204 = vld [vmem:[%s2 + $0x10] sm:$0xff]
        %v205 = vld [vmem:[%s2 + $0x18] sm:$0xff]
        %v206 = vld [vmem:[%s2 + $0x20] sm:$0xff]
        %v207 = vld [vmem:[%s2 + $0x28] sm:$0xff]
        %v208 = vld [vmem:[%s2 + $0x30] sm:$0xff]
        %v209 = vld [vmem:[%s2 + $0x38] sm:$0xff]
        %v210 = vld [vmem:[%s2 + $0x40] sm:$0xff]
        %v211 = vld [vmem:[%s2 + $0x48] sm:$0xff]
        %v212 = vld [vmem:[%s2 + $0x50] sm:$0xff]
        %v213 = vld [vmem:[%s2 + $0x58] sm:$0xff]
        %v214 = vld [vmem:[%s2 + $0x60] sm:$0xff]
        %v215 = vld [vmem:[%s2 + $0x68] sm:$0xff]
        %v216 = vld [vmem:[%s2 + $0x70] sm:$0xff]
        %v217 = vld [vmem:[%s2 + $0x78] sm:$0xff]
        %v218 = vmul.f32 %v200, %v200
        %v219 = vld [vmem:[%s3] sm:$0xff]
        %v220 = vld [vmem:[%s3 + $0x8] sm:$0xff]
        %v221 = vld [vmem:[%s3 + $0x10] sm:$0xff]
        %v222 = vld [vmem:[%s3 + $0x18] sm:$0xff]
        %v223 = vld [vmem:[%s3 + $0x20] sm:$0xff]
        %v224 = vld [vmem:[%s3 + $0x28] sm:$0xff]
        %v225 = vld [vmem:[%s3 + $0x30] sm:$0xff]
        %v226 = vld [vmem:[%s3 + $0x38] sm:$0xff]
        %v227 = vld [vmem:[%s3 + $0x40] sm:$0xff]
        %v228 = vld [vmem:[%s3 + $0x48] sm:$0xff]
        %v229 = vld [vmem:[%s3 + $0x50] sm:$0xff]
        %v230 = vld [vmem:[%s3 + $0x58] sm:$0xff]
        %v231 = vld [vmem:[%s3 + $0x80] sm:$0xff]
        %v232 = vld [vmem:[%s3 + $0x88] sm:$0xff]
        %v233 = vld [vmem:[%s3 + $0x90] sm:$0xff]
        %v234 = vld [vmem:[%s3 + $0x98] sm:$0xff]
        %v235 = vld [vmem:[%s3 + $0xa0] sm:$0xff]
        %v236 = vld [vmem:[%s3 + $0xa8] sm:$0xff]
        %v237 = vld [vmem:[%s3 + $0xb0] sm:$0xff]
        %v238 = vld [vmem:[%s3 + $0xb8] sm:$0xff]
        %v239 = vld [vmem:[%s3 + $0xc0] sm:$0xff]
        %v240 = vld [vmem:[%s3 + $0xc8] sm:$0xff]
        %v241 = vld [vmem:[%s3 + $0xd0] sm:$0xff]
        %v242 = vld [vmem:[%s3 + $0xd8] sm:$0xff]
        %v243 = vld [vmem:[%s3 + $0xe0] sm:$0xff]
        %v244 = vld [vmem:[%s3 + $0xe8] sm:$0xff]
        %v245 = vld [vmem:[%s3 + $0xf0] sm:$0xff]
        %v246 = vld [vmem:[%s3 + $0xf8] sm:$0xff]
        %v247 = vld [vmem:[%s3 + $0x100] sm:$0xff]
        %v248 = vld [vmem:[%s3 + $0x108] sm:$0xff]
        %v249 = vld [vmem:[%s3 + $0x110] sm:$0xff]
        %v250 = vld [vmem:[%s3 + $0x118] sm:$0xff]
        %v251 = vld [vmem:[%s3 + $0x120] sm:$0xff]
        %v252 = vld [vmem:[%s3 + $0x128] sm:$0xff]
        %v253 = vld [vmem:[%s3 + $0x130] sm:$0xff]
        %v254 = vld [vmem:[%s3 + $0x138] sm:$0xff]
        %vm255 = vcmask 785408
        %v257 = vsel %vm255, %v218, 0
        %259 = vmatprep.subr.mxu0 0.0
        %260 = vmatpush1.msra.mxu0 %v243
        %261 = vmatprep.subr.mxu0 0.0
        %262 = vmatpush1.msra.mxu0 %v244
        %263 = vmatprep.subr.mxu0 0.0
        %264 = vmatpush1.msra.mxu0 %v245
        %265 = vmatprep.subr.mxu0 0.0
        %266 = vmatpush1.msra.mxu0 %v246
        %267 = vmatprep.subr.mxu0 0.0
        %268 = vmatpush1.msra.mxu0 %v247
        %269 = vmatprep.subr.mxu0 0.0
        %270 = vmatpush1.msra.mxu0 %v248
        %271 = vmatprep.subr.mxu0 0.0
        %272 = vmatpush1.msra.mxu0 %v249
        %273 = vmatprep.subr.mxu0 0.0
        %274 = vmatpush1.msra.mxu0 %v250
        %275 = vmatprep.subr.mxu0 0.0
        %276 = vmatpush1.msra.mxu0 %v251
        %277 = vmatprep.subr.mxu0 0.0
        %278 = vmatpush1.msra.mxu0 %v252
        %279 = vmatprep.subr.mxu0 0.0
        %280 = vmatpush1.msra.mxu0 %v253
        %281 = vmatprep.subr.mxu0 0.0
        %282 = vmatpush1.msra.mxu0 %v254
        %283 = vmatprep.subr.mxu0 0.0
        %284 = vmatpush1.msra.mxu0 0.0
        %285 = vmatprep.subr.mxu0 0.0
        %286 = vmatpush1.msra.mxu0 0.0
        %287 = vmatprep.subr.mxu0 0.0
        %288 = vmatpush1.msra.mxu0 0.0
        %289 = vmatprep.subr.mxu0 0.0
        %290 = vmatpush1.msra.mxu0 0.0
        %291 = vmatprep.subr.mxu0 0.0
        %292 = vmatpush1.msra.mxu0 0.0
        %293 = vmatprep.subr.mxu0 0.0
        %294 = vmatpush1.msra.mxu0 0.0
        %295 = vmatprep.subr.mxu0 0.0
        %296 = vmatpush1.msra.mxu0 0.0
        %297 = vmatprep.subr.mxu0 0.0
        %298 = vmatpush1.msra.mxu0 0.0
        %299 = vmatprep.subr.mxu0 0.0
        %300 = vmatpush1.msra.mxu0 0.0
        %301 = vmatprep.subr.mxu0 0.0
        %302 = vmatpush1.msra.mxu0 0.0
        %303 = vmatprep.subr.mxu0 0.0
        %304 = vmatpush1.msra.mxu0 0.0
        %305 = vmatprep.subr.mxu0 0.0
        %306 = vmatpush1.msra.mxu0 0.0
        %307 = vmatprep.subr.mxu0 0.0
        %308 = vmatpush1.msra.mxu0 0.0
        %309 = vmatprep.subr.mxu0 0.0
        %310 = vmatpush1.msra.mxu0 0.0
        %311 = vmatprep.subr.mxu0 0.0
        %312 = vmatpush1.msra.mxu0 0.0
        %313 = vmatprep.subr.mxu0 0.0
        %314 = vmatpush1.msra.mxu0 0.0
        %315 = vmatprep.subr.mxu0 0.0
        %316 = vmatpush1.msra.mxu0 0.0
        %317 = vmatprep.subr.mxu0 0.0
        %318 = vmatpush1.msra.mxu0 0.0
        %319 = vmatprep.subr.mxu0 0.0
        %320 = vmatpush1.msra.mxu0 0.0
        %321 = vmatprep.subr.mxu0 0.0
        %322 = vmatpush1.msra.mxu0 0.0
        %323 = vmatprep.mubr.f32.mxu0 0.0
        %324 = vmatmul.mubr.f32.gmra.mrb[0].mxu0 %v257
        %v325 = vpop.f32.mrb[0].mxu0
        %v326 = vadd.f32 0.0, %v325
        %v327 = vpop.f32.mrb[0].mxu0
        %328 = vdwg.mxu0
        %v330 = vsel %vm255, %v200, 0
        %332 = vmatprep.subr.mxu0 0.0
        %333 = vmatpush1.msra.mxu0 %v231
        %334 = vmatprep.subr.mxu0 0.0
        %335 = vmatpush1.msra.mxu0 %v232
        %336 = vmatprep.subr.mxu0 0.0
        %337 = vmatpush1.msra.mxu0 %v233
        %338 = vmatprep.subr.mxu0 0.0
        %339 = vmatpush1.msra.mxu0 %v234
        %340 = vmatprep.subr.mxu0 0.0
        %341 = vmatpush1.msra.mxu0 %v235
        %342 = vmatprep.subr.mxu0 0.0
        %343 = vmatpush1.msra.mxu0 %v236
        %344 = vmatprep.subr.mxu0 0.0
        %345 = vmatpush1.msra.mxu0 %v237
        %346 = vmatprep.subr.mxu0 0.0
        %347 = vmatpush1.msra.mxu0 %v238
        %348 = vmatprep.subr.mxu0 0.0
        %349 = vmatpush1.msra.mxu0 %v239
        %350 = vmatprep.subr.mxu0 0.0
        %351 = vmatpush1.msra.mxu0 %v240
        %352 = vmatprep.subr.mxu0 0.0
        %353 = vmatpush1.msra.mxu0 %v241
        %354 = vmatprep.subr.mxu0 0.0
        %355 = vmatpush1.msra.mxu0 %v242
        %356 = vmatprep.subr.mxu0 0.0
        %357 = vmatpush1.msra.mxu0 0.0
        %358 = vmatprep.subr.mxu0 0.0
        %359 = vmatpush1.msra.mxu0 0.0
        %360 = vmatprep.subr.mxu0 0.0
        %361 = vmatpush1.msra.mxu0 0.0
        %362 = vmatprep.subr.mxu0 0.0
        %363 = vmatpush1.msra.mxu0 0.0
        %364 = vmatprep.subr.mxu0 0.0
        %365 = vmatpush1.msra.mxu0 0.0
        %366 = vmatprep.subr.mxu0 0.0
        %367 = vmatpush1.msra.mxu0 0.0
        %368 = vmatprep.subr.mxu0 0.0
        %369 = vmatpush1.msra.mxu0 0.0
        %370 = vmatprep.subr.mxu0 0.0
        %371 = vmatpush1.msra.mxu0 0.0
        %372 = vmatprep.subr.mxu0 0.0
        %373 = vmatpush1.msra.mxu0 0.0
        %374 = vmatprep.subr.mxu0 0.0
        %375 = vmatpush1.msra.mxu0 0.0
        %376 = vmatprep.subr.mxu0 0.0
        %377 = vmatpush1.msra.mxu0 0.0
        %378 = vmatprep.subr.mxu0 0.0
        %379 = vmatpush1.msra.mxu0 0.0
        %380 = vmatprep.subr.mxu0 0.0
        %381 = vmatpush1.msra.mxu0 0.0
        %382 = vmatprep.subr.mxu0 0.0
        %383 = vmatpush1.msra.mxu0 0.0
        %384 = vmatprep.subr.mxu0 0.0
        %385 = vmatpush1.msra.mxu0 0.0
        %386 = vmatprep.subr.mxu0 0.0
        %387 = vmatpush1.msra.mxu0 0.0
        %388 = vmatprep.subr.mxu0 0.0
        %389 = vmatpush1.msra.mxu0 0.0
        %390 = vmatprep.subr.mxu0 0.0
        %391 = vmatpush1.msra.mxu0 0.0
        %392 = vmatprep.subr.mxu0 0.0
        %393 = vmatpush1.msra.mxu0 0.0
        %394 = vmatprep.subr.mxu0 0.0
        %395 = vmatpush1.msra.mxu0 0.0
        %396 = vmatprep.mubr.f32.mxu0 0.0
        %397 = vmatmul.mubr.f32.gmra.mrb[0].mxu0 %v330
        %v398 = vpop.f32.mrb[0].mxu0
        %v399 = vadd.f32 %v326, %v398
        %v400 = vpop.f32.mrb[0].mxu0
        %401 = vdwg.mxu0
        %vm402 = vcmask 261120
        %v404 = vsel %vm402, %v201, 0
        %406 = vmatprep.subr.mxu0 0.0
        %407 = vmatpush1.msra.mxu0 %v214
        %408 = vmatprep.subr.mxu0 0.0
        %409 = vmatpush1.msra.mxu0 %v215
        %410 = vmatprep.subr.mxu0 0.0
        %411 = vmatpush1.msra.mxu0 %v216
        %412 = vmatprep.subr.mxu0 0.0
        %413 = vmatpush1.msra.mxu0 %v217
        %414 = vmatprep.subr.mxu0 0.0
        %415 = vmatpush1.msra.mxu0 0.0
        %416 = vmatprep.subr.mxu0 0.0
        %417 = vmatpush1.msra.mxu0 0.0
        %418 = vmatprep.subr.mxu0 0.0
        %419 = vmatpush1.msra.mxu0 0.0
        %420 = vmatprep.subr.mxu0 0.0
        %421 = vmatpush1.msra.mxu0 0.0
        %422 = vmatprep.subr.mxu0 0.0
        %423 = vmatpush1.msra.mxu0 0.0
        %424 = vmatprep.subr.mxu0 0.0
        %425 = vmatpush1.msra.mxu0 0.0
        %426 = vmatprep.subr.mxu0 0.0
        %427 = vmatpush1.msra.mxu0 0.0
        %428 = vmatprep.subr.mxu0 0.0
        %429 = vmatpush1.msra.mxu0 0.0
        %430 = vmatprep.subr.mxu0 0.0
        %431 = vmatpush1.msra.mxu0 0.0
        %432 = vmatprep.subr.mxu0 0.0
        %433 = vmatpush1.msra.mxu0 0.0
        %434 = vmatprep.subr.mxu0 0.0
        %435 = vmatpush1.msra.mxu0 0.0
        %436 = vmatprep.subr.mxu0 0.0
        %437 = vmatpush1.msra.mxu0 0.0
        %438 = vmatprep.subr.mxu0 0.0
        %439 = vmatpush1.msra.mxu0 0.0
        %440 = vmatprep.subr.mxu0 0.0
        %441 = vmatpush1.msra.mxu0 0.0
        %442 = vmatprep.subr.mxu0 0.0
        %443 = vmatpush1.msra.mxu0 0.0
        %444 = vmatprep.subr.mxu0 0.0
        %445 = vmatpush1.msra.mxu0 0.0
        %446 = vmatprep.subr.mxu0 0.0
        %447 = vmatpush1.msra.mxu0 0.0
        %448 = vmatprep.subr.mxu0 0.0
        %449 = vmatpush1.msra.mxu0 0.0
        %450 = vmatprep.subr.mxu0 0.0
        %451 = vmatpush1.msra.mxu0 0.0
        %452 = vmatprep.subr.mxu0 0.0
        %453 = vmatpush1.msra.mxu0 0.0
        %454 = vmatprep.subr.mxu0 0.0
        %455 = vmatpush1.msra.mxu0 0.0
        %456 = vmatprep.subr.mxu0 0.0
        %457 = vmatpush1.msra.mxu0 0.0
        %458 = vmatprep.subr.mxu0 0.0
        %459 = vmatpush1.msra.mxu0 0.0
        %460 = vmatprep.subr.mxu0 0.0
        %461 = vmatpush1.msra.mxu0 0.0
        %462 = vmatprep.subr.mxu0 0.0
        %463 = vmatpush1.msra.mxu0 0.0
        %464 = vmatprep.subr.mxu0 0.0
        %465 = vmatpush1.msra.mxu0 0.0
        %466 = vmatprep.subr.mxu0 0.0
        %467 = vmatpush1.msra.mxu0 0.0
        %468 = vmatprep.subr.mxu0 0.0
        %469 = vmatpush1.msra.mxu0 0.0
        %470 = vmatprep.mubr.f32.mxu0 0.0
        %471 = vmatmul.mubr.f32.gmra.mrb[0].mxu0 %v404
        %v472 = vpop.f32.mrb[0].mxu0
        %v473 = vadd.f32 0.0, %v472
        %v474 = vpop.f32.mrb[0].mxu0
        %475 = vdwg.mxu0
        %476 = vmatprep.subr.mxu0 0.0
        %477 = vmatpush1.msra.mxu0 %v202
        %478 = vmatprep.subr.mxu0 0.0
        %479 = vmatpush1.msra.mxu0 %v203
        %480 = vmatprep.subr.mxu0 0.0
        %481 = vmatpush1.msra.mxu0 %v204
        %482 = vmatprep.subr.mxu0 0.0
        %483 = vmatpush1.msra.mxu0 %v205
        %484 = vmatprep.subr.mxu0 0.0
        %485 = vmatpush1.msra.mxu0 %v206
        %486 = vmatprep.subr.mxu0 0.0
        %487 = vmatpush1.msra.mxu0 %v207
        %488 = vmatprep.subr.mxu0 0.0
        %489 = vmatpush1.msra.mxu0 %v208
        %490 = vmatprep.subr.mxu0 0.0
        %491 = vmatpush1.msra.mxu0 %v209
        %492 = vmatprep.subr.mxu0 0.0
        %493 = vmatpush1.msra.mxu0 %v210
        %494 = vmatprep.subr.mxu0 0.0
        %495 = vmatpush1.msra.mxu0 %v211
        %496 = vmatprep.subr.mxu0 0.0
        %497 = vmatpush1.msra.mxu0 %v212
        %498 = vmatprep.subr.mxu0 0.0
        %499 = vmatpush1.msra.mxu0 %v213
        %500 = vmatprep.subr.mxu0 0.0
        %501 = vmatpush1.msra.mxu0 0.0
        %502 = vmatprep.subr.mxu0 0.0
        %503 = vmatpush1.msra.mxu0 0.0
        %504 = vmatprep.subr.mxu0 0.0
        %505 = vmatpush1.msra.mxu0 0.0
        %506 = vmatprep.subr.mxu0 0.0
        %507 = vmatpush1.msra.mxu0 0.0
        %508 = vmatprep.subr.mxu0 0.0
        %509 = vmatpush1.msra.mxu0 0.0
        %510 = vmatprep.subr.mxu0 0.0
        %511 = vmatpush1.msra.mxu0 0.0
        %512 = vmatprep.subr.mxu0 0.0
        %513 = vmatpush1.msra.mxu0 0.0
        %514 = vmatprep.subr.mxu0 0.0
        %515 = vmatpush1.msra.mxu0 0.0
        %516 = vmatprep.subr.mxu0 0.0
        %517 = vmatpush1.msra.mxu0 0.0
        %518 = vmatprep.subr.mxu0 0.0
        %519 = vmatpush1.msra.mxu0 0.0
        %520 = vmatprep.subr.mxu0 0.0
        %521 = vmatpush1.msra.mxu0 0.0
        %522 = vmatprep.subr.mxu0 0.0
        %523 = vmatpush1.msra.mxu0 0.0
        %524 = vmatprep.subr.mxu0 0.0
        %525 = vmatpush1.msra.mxu0 0.0
        %526 = vmatprep.subr.mxu0 0.0
        %527 = vmatpush1.msra.mxu0 0.0
        %528 = vmatprep.subr.mxu0 0.0
        %529 = vmatpush1.msra.mxu0 0.0
        %530 = vmatprep.subr.mxu0 0.0
        %531 = vmatpush1.msra.mxu0 0.0
        %532 = vmatprep.subr.mxu0 0.0
        %533 = vmatpush1.msra.mxu0 0.0
        %534 = vmatprep.subr.mxu0 0.0
        %535 = vmatpush1.msra.mxu0 0.0
        %536 = vmatprep.subr.mxu0 0.0
        %537 = vmatpush1.msra.mxu0 0.0
        %538 = vmatprep.subr.mxu0 0.0
        %539 = vmatpush1.msra.mxu0 0.0
        %540 = vmatprep.mubr.f32.mxu0 0.0
        %541 = vmatmul.mubr.f32.gmra.mrb[0].mxu0 %v330
        %v542 = vpop.f32.mrb[0].mxu0
        %v543 = vadd.f32 %v473, %v542
        %v544 = vpop.f32.mrb[0].mxu0
        %545 = vdwg.mxu0
        %v546 = vtanh.pop %v543
        %v547 = vld [vmem:[%s3 + $0x1a0] sm:$0x1]
        %v548 = vld [vmem:[%s3 + $0x60] sm:$0xff]
        %v549 = vld [vmem:[%s3 + $0x68] sm:$0xff]
        %v550 = vld [vmem:[%s3 + $0x70] sm:$0xff]
        %v551 = vld [vmem:[%s3 + $0x78] sm:$0xff]
        %v553 = vsel %vm402, %v546, 0
        %555 = vmatprep.subr.mxu0 0.0
        %556 = vmatpush1.msra.mxu0 %v548
        %557 = vmatprep.subr.mxu0 0.0
        %558 = vmatpush1.msra.mxu0 %v549
        %559 = vmatprep.subr.mxu0 0.0
        %560 = vmatpush1.msra.mxu0 %v550
        %561 = vmatprep.subr.mxu0 0.0
        %562 = vmatpush1.msra.mxu0 %v551
        %563 = vmatprep.subr.mxu0 0.0
        %564 = vmatpush1.msra.mxu0 0.0
        %565 = vmatprep.subr.mxu0 0.0
        %566 = vmatpush1.msra.mxu0 0.0
        %567 = vmatprep.subr.mxu0 0.0
        %568 = vmatpush1.msra.mxu0 0.0
        %569 = vmatprep.subr.mxu0 0.0
        %570 = vmatpush1.msra.mxu0 0.0
        %571 = vmatprep.subr.mxu0 0.0
        %572 = vmatpush1.msra.mxu0 0.0
        %573 = vmatprep.subr.mxu0 0.0
        %574 = vmatpush1.msra.mxu0 0.0
        %575 = vmatprep.subr.mxu0 0.0
        %576 = vmatpush1.msra.mxu0 0.0
        %577 = vmatprep.subr.mxu0 0.0
        %578 = vmatpush1.msra.mxu0 0.0
        %579 = vmatprep.subr.mxu0 0.0
        %580 = vmatpush1.msra.mxu0 0.0
        %581 = vmatprep.subr.mxu0 0.0
        %582 = vmatpush1.msra.mxu0 0.0
        %583 = vmatprep.subr.mxu0 0.0
        %584 = vmatpush1.msra.mxu0 0.0
        %585 = vmatprep.subr.mxu0 0.0
        %586 = vmatpush1.msra.mxu0 0.0
        %587 = vmatprep.subr.mxu0 0.0
        %588 = vmatpush1.msra.mxu0 0.0
        %589 = vmatprep.subr.mxu0 0.0
        %590 = vmatpush1.msra.mxu0 0.0
        %591 = vmatprep.subr.mxu0 0.0
        %592 = vmatpush1.msra.mxu0 0.0
        %593 = vmatprep.subr.mxu0 0.0
        %594 = vmatpush1.msra.mxu0 0.0
        %595 = vmatprep.subr.mxu0 0.0
        %596 = vmatpush1.msra.mxu0 0.0
        %597 = vmatprep.subr.mxu0 0.0
        %598 = vmatpush1.msra.mxu0 0.0
        %599 = vmatprep.subr.mxu0 0.0
        %600 = vmatpush1.msra.mxu0 0.0
        %601 = vmatprep.subr.mxu0 0.0
        %602 = vmatpush1.msra.mxu0 0.0
        %603 = vmatprep.subr.mxu0 0.0
        %604 = vmatpush1.msra.mxu0 0.0
        %605 = vmatprep.subr.mxu0 0.0
        %606 = vmatpush1.msra.mxu0 0.0
        %607 = vmatprep.subr.mxu0 0.0
        %608 = vmatpush1.msra.mxu0 0.0
        %609 = vmatprep.subr.mxu0 0.0
        %610 = vmatpush1.msra.mxu0 0.0
        %611 = vmatprep.subr.mxu0 0.0
        %612 = vmatpush1.msra.mxu0 0.0
        %613 = vmatprep.subr.mxu0 0.0
        %614 = vmatpush1.msra.mxu0 0.0
        %615 = vmatprep.subr.mxu0 0.0
        %616 = vmatpush1.msra.mxu0 0.0
        %617 = vmatprep.subr.mxu0 0.0
        %618 = vmatpush1.msra.mxu0 0.0
        %619 = vmatprep.mubr.f32.mxu0 0.0
        %620 = vmatmul.mubr.f32.gmra.mrb[0].mxu0 %v553
        %v621 = vpop.f32.mrb[0].mxu0
        %v622 = vadd.f32 0.0, %v621
        %v623 = vpop.f32.mrb[0].mxu0
        %624 = vdwg.mxu0
        %625 = vmatprep.subr.mxu0 0.0
        %626 = vmatpush1.msra.mxu0 %v219
        %627 = vmatprep.subr.mxu0 0.0
        %628 = vmatpush1.msra.mxu0 %v220
        %629 = vmatprep.subr.mxu0 0.0
        %630 = vmatpush1.msra.mxu0 %v221
        %631 = vmatprep.subr.mxu0 0.0
        %632 = vmatpush1.msra.mxu0 %v222
        %633 = vmatprep.subr.mxu0 0.0
        %634 = vmatpush1.msra.mxu0 %v223
        %635 = vmatprep.subr.mxu0 0.0
        %636 = vmatpush1.msra.mxu0 %v224
        %637 = vmatprep.subr.mxu0 0.0
        %638 = vmatpush1.msra.mxu0 %v225
        %639 = vmatprep.subr.mxu0 0.0
        %640 = vmatpush1.msra.mxu0 %v226
        %641 = vmatprep.subr.mxu0 0.0
        %642 = vmatpush1.msra.mxu0 %v227
        %643 = vmatprep.subr.mxu0 0.0
        %644 = vmatpush1.msra.mxu0 %v228
        %645 = vmatprep.subr.mxu0 0.0
        %646 = vmatpush1.msra.mxu0 %v229
        %647 = vmatprep.subr.mxu0 0.0
        %648 = vmatpush1.msra.mxu0 %v230
        %649 = vmatprep.subr.mxu0 0.0
        %650 = vmatpush1.msra.mxu0 0.0
        %651 = vmatprep.subr.mxu0 0.0
        %652 = vmatpush1.msra.mxu0 0.0
        %653 = vmatprep.subr.mxu0 0.0
        %654 = vmatpush1.msra.mxu0 0.0
        %655 = vmatprep.subr.mxu0 0.0
        %656 = vmatpush1.msra.mxu0 0.0
        %657 = vmatprep.subr.mxu0 0.0
        %658 = vmatpush1.msra.mxu0 0.0
        %659 = vmatprep.subr.mxu0 0.0
        %660 = vmatpush1.msra.mxu0 0.0
        %661 = vmatprep.subr.mxu0 0.0
        %662 = vmatpush1.msra.mxu0 0.0
        %663 = vmatprep.subr.mxu0 0.0
        %664 = vmatpush1.msra.mxu0 0.0
        %665 = vmatprep.subr.mxu0 0.0
        %666 = vmatpush1.msra.mxu0 0.0
        %667 = vmatprep.subr.mxu0 0.0
        %668 = vmatpush1.msra.mxu0 0.0
        %669 = vmatprep.subr.mxu0 0.0
        %670 = vmatpush1.msra.mxu0 0.0
        %671 = vmatprep.subr.mxu0 0.0
        %672 = vmatpush1.msra.mxu0 0.0
        %673 = vmatprep.subr.mxu0 0.0
        %674 = vmatpush1.msra.mxu0 0.0
        %675 = vmatprep.subr.mxu0 0.0
        %676 = vmatpush1.msra.mxu0 0.0
        %677 = vmatprep.subr.mxu0 0.0
        %678 = vmatpush1.msra.mxu0 0.0
        %679 = vmatprep.subr.mxu0 0.0
        %680 = vmatpush1.msra.mxu0 0.0
        %681 = vmatprep.subr.mxu0 0.0
        %682 = vmatpush1.msra.mxu0 0.0
        %683 = vmatprep.subr.mxu0 0.0
        %684 = vmatpush1.msra.mxu0 0.0
        %685 = vmatprep.subr.mxu0 0.0
        %686 = vmatpush1.msra.mxu0 0.0
        %687 = vmatprep.subr.mxu0 0.0
        %688 = vmatpush1.msra.mxu0 0.0
        %689 = vmatprep.mubr.f32.mxu0 0.0
        %690 = vmatmul.mubr.f32.gmra.mrb[0].mxu0 %v330
        %v691 = vpop.f32.mrb[0].mxu0
        %v692 = vadd.f32 %v622, %v691
        %v693 = vpop.f32.mrb[0].mxu0
        %694 = vdwg.mxu0
        %v695 = vlaneseq
        %v696 = vshrl.u32 %v695, 7
        %v697 = vsub.s32 0, %v696
        %v698 = vrot.slane %v547, %v697
        %v699 = vadd.f32 %v692, %v698
        %v700 = vtanh.pop %v699
        %v701 = vld [vmem:[%s3 + $0x1a8] sm:$0x1]
        %v702 = vld [vmem:[%s3 + $0x140] sm:$0xff]
        %v703 = vld [vmem:[%s3 + $0x148] sm:$0xff]
        %v704 = vld [vmem:[%s3 + $0x150] sm:$0xff]
        %v705 = vld [vmem:[%s3 + $0x158] sm:$0xff]
        %706 = vmatprep.subr.mxu0 0.0
        %707 = vmatpush1.msra.mxu0 %v702
        %708 = vmatprep.subr.mxu0 0.0
        %709 = vmatpush1.msra.mxu0 %v703
        %710 = vmatprep.subr.mxu0 0.0
        %711 = vmatpush1.msra.mxu0 %v704
        %712 = vmatprep.subr.mxu0 0.0
        %713 = vmatpush1.msra.mxu0 %v705
        %714 = vmatprep.subr.mxu0 0.0
        %715 = vmatpush1.msra.mxu0 0.0
        %716 = vmatprep.subr.mxu0 0.0
        %717 = vmatpush1.msra.mxu0 0.0
        %718 = vmatprep.subr.mxu0 0.0
        %719 = vmatpush1.msra.mxu0 0.0
        %720 = vmatprep.subr.mxu0 0.0
        %721 = vmatpush1.msra.mxu0 0.0
        %722 = vmatprep.subr.mxu0 0.0
        %723 = vmatpush1.msra.mxu0 0.0
        %724 = vmatprep.subr.mxu0 0.0
        %725 = vmatpush1.msra.mxu0 0.0
        %726 = vmatprep.subr.mxu0 0.0
        %727 = vmatpush1.msra.mxu0 0.0
        %728 = vmatprep.subr.mxu0 0.0
        %729 = vmatpush1.msra.mxu0 0.0
        %730 = vmatprep.subr.mxu0 0.0
        %731 = vmatpush1.msra.mxu0 0.0
        %732 = vmatprep.subr.mxu0 0.0
        %733 = vmatpush1.msra.mxu0 0.0
        %734 = vmatprep.subr.mxu0 0.0
        %735 = vmatpush1.msra.mxu0 0.0
        %736 = vmatprep.subr.mxu0 0.0
        %737 = vmatpush1.msra.mxu0 0.0
        %738 = vmatprep.subr.mxu0 0.0
        %739 = vmatpush1.msra.mxu0 0.0
        %740 = vmatprep.subr.mxu0 0.0
        %741 = vmatpush1.msra.mxu0 0.0
        %742 = vmatprep.subr.mxu0 0.0
        %743 = vmatpush1.msra.mxu0 0.0
        %744 = vmatprep.subr.mxu0 0.0
        %745 = vmatpush1.msra.mxu0 0.0
        %746 = vmatprep.subr.mxu0 0.0
        %747 = vmatpush1.msra.mxu0 0.0
        %748 = vmatprep.subr.mxu0 0.0
        %749 = vmatpush1.msra.mxu0 0.0
        %750 = vmatprep.subr.mxu0 0.0
        %751 = vmatpush1.msra.mxu0 0.0
        %752 = vmatprep.subr.mxu0 0.0
        %753 = vmatpush1.msra.mxu0 0.0
        %754 = vmatprep.subr.mxu0 0.0
        %755 = vmatpush1.msra.mxu0 0.0
        %756 = vmatprep.subr.mxu0 0.0
        %757 = vmatpush1.msra.mxu0 0.0
        %758 = vmatprep.subr.mxu0 0.0
        %759 = vmatpush1.msra.mxu0 0.0
        %760 = vmatprep.subr.mxu0 0.0
        %761 = vmatpush1.msra.mxu0 0.0
        %762 = vmatprep.subr.mxu0 0.0
        %763 = vmatpush1.msra.mxu0 0.0
        %764 = vmatprep.subr.mxu0 0.0
        %765 = vmatpush1.msra.mxu0 0.0
        %766 = vmatprep.subr.mxu0 0.0
        %767 = vmatpush1.msra.mxu0 0.0
        %768 = vmatprep.subr.mxu0 0.0
        %769 = vmatpush1.msra.mxu0 0.0
        %770 = vmatprep.mubr.f32.mxu0 0.0
        %771 = vmatmul.mubr.f32.gmra.mrb[0].mxu0 %v553
        %v772 = vpop.f32.mrb[0].mxu0
        %v773 = vadd.f32 0.0, %v772
        %v774 = vpop.f32.mrb[0].mxu0
        %775 = vdwg.mxu0
        %v776 = vadd.f32 %v399, %v773
        %v777 = vmul.f32 %v546, %v546
        %v778 = vld [vmem:[%s3 + $0x160] sm:$0xff]
        %v779 = vld [vmem:[%s3 + $0x168] sm:$0xff]
        %v780 = vld [vmem:[%s3 + $0x170] sm:$0xff]
        %v781 = vld [vmem:[%s3 + $0x178] sm:$0xff]
        %v783 = vsel %vm402, %v777, 0
        %785 = vmatprep.subr.mxu0 0.0
        %786 = vmatpush1.msra.mxu0 %v778
        %787 = vmatprep.subr.mxu0 0.0
        %788 = vmatpush1.msra.mxu0 %v779
        %789 = vmatprep.subr.mxu0 0.0
        %790 = vmatpush1.msra.mxu0 %v780
        %791 = vmatprep.subr.mxu0 0.0
        %792 = vmatpush1.msra.mxu0 %v781
        %793 = vmatprep.subr.mxu0 0.0
        %794 = vmatpush1.msra.mxu0 0.0
        %795 = vmatprep.subr.mxu0 0.0
        %796 = vmatpush1.msra.mxu0 0.0
        %797 = vmatprep.subr.mxu0 0.0
        %798 = vmatpush1.msra.mxu0 0.0
        %799 = vmatprep.subr.mxu0 0.0
        %800 = vmatpush1.msra.mxu0 0.0
        %801 = vmatprep.subr.mxu0 0.0
        %802 = vmatpush1.msra.mxu0 0.0
        %803 = vmatprep.subr.mxu0 0.0
        %804 = vmatpush1.msra.mxu0 0.0
        %805 = vmatprep.subr.mxu0 0.0
        %806 = vmatpush1.msra.mxu0 0.0
        %807 = vmatprep.subr.mxu0 0.0
        %808 = vmatpush1.msra.mxu0 0.0
        %809 = vmatprep.subr.mxu0 0.0
        %810 = vmatpush1.msra.mxu0 0.0
        %811 = vmatprep.subr.mxu0 0.0
        %812 = vmatpush1.msra.mxu0 0.0
        %813 = vmatprep.subr.mxu0 0.0
        %814 = vmatpush1.msra.mxu0 0.0
        %815 = vmatprep.subr.mxu0 0.0
        %816 = vmatpush1.msra.mxu0 0.0
        %817 = vmatprep.subr.mxu0 0.0
        %818 = vmatpush1.msra.mxu0 0.0
        %819 = vmatprep.subr.mxu0 0.0
        %820 = vmatpush1.msra.mxu0 0.0
        %821 = vmatprep.subr.mxu0 0.0
        %822 = vmatpush1.msra.mxu0 0.0
        %823 = vmatprep.subr.mxu0 0.0
        %824 = vmatpush1.msra.mxu0 0.0
        %825 = vmatprep.subr.mxu0 0.0
        %826 = vmatpush1.msra.mxu0 0.0
        %827 = vmatprep.subr.mxu0 0.0
        %828 = vmatpush1.msra.mxu0 0.0
        %829 = vmatprep.subr.mxu0 0.0
        %830 = vmatpush1.msra.mxu0 0.0
        %831 = vmatprep.subr.mxu0 0.0
        %832 = vmatpush1.msra.mxu0 0.0
        %833 = vmatprep.subr.mxu0 0.0
        %834 = vmatpush1.msra.mxu0 0.0
        %835 = vmatprep.subr.mxu0 0.0
        %836 = vmatpush1.msra.mxu0 0.0
        %837 = vmatprep.subr.mxu0 0.0
        %838 = vmatpush1.msra.mxu0 0.0
        %839 = vmatprep.subr.mxu0 0.0
        %840 = vmatpush1.msra.mxu0 0.0
        %841 = vmatprep.subr.mxu0 0.0
        %842 = vmatpush1.msra.mxu0 0.0
        %843 = vmatprep.subr.mxu0 0.0
        %844 = vmatpush1.msra.mxu0 0.0
        %845 = vmatprep.subr.mxu0 0.0
        %846 = vmatpush1.msra.mxu0 0.0
        %847 = vmatprep.subr.mxu0 0.0
        %848 = vmatpush1.msra.mxu0 0.0
        %849 = vmatprep.mubr.f32.mxu0 0.0
        %850 = vmatmul.mubr.f32.gmra.mrb[0].mxu0 %v783
        %v851 = vpop.f32.mrb[0].mxu0
        %v852 = vadd.f32 0.0, %v851
        %v853 = vpop.f32.mrb[0].mxu0
        %854 = vdwg.mxu0
        %v855 = vadd.f32 %v776, %v852
        %v856 = vld [vmem:[%s3 + $0x180] sm:$0xff]
        %v857 = vld [vmem:[%s3 + $0x188] sm:$0xff]
        %vm858 = vcmask 130048
        %v860 = vsel %vm858, %v700, 0
        %862 = vmatprep.subr.mxu0 0.0
        %863 = vmatpush1.msra.mxu0 %v856
        %864 = vmatprep.subr.mxu0 0.0
        %865 = vmatpush1.msra.mxu0 %v857
        %866 = vmatprep.subr.mxu0 0.0
        %867 = vmatpush1.msra.mxu0 0.0
        %868 = vmatprep.subr.mxu0 0.0
        %869 = vmatpush1.msra.mxu0 0.0
        %870 = vmatprep.subr.mxu0 0.0
        %871 = vmatpush1.msra.mxu0 0.0
        %872 = vmatprep.subr.mxu0 0.0
        %873 = vmatpush1.msra.mxu0 0.0
        %874 = vmatprep.subr.mxu0 0.0
        %875 = vmatpush1.msra.mxu0 0.0
        %876 = vmatprep.subr.mxu0 0.0
        %877 = vmatpush1.msra.mxu0 0.0
        %878 = vmatprep.subr.mxu0 0.0
        %879 = vmatpush1.msra.mxu0 0.0
        %880 = vmatprep.subr.mxu0 0.0
        %881 = vmatpush1.msra.mxu0 0.0
        %882 = vmatprep.subr.mxu0 0.0
        %883 = vmatpush1.msra.mxu0 0.0
        %884 = vmatprep.subr.mxu0 0.0
        %885 = vmatpush1.msra.mxu0 0.0
        %886 = vmatprep.subr.mxu0 0.0
        %887 = vmatpush1.msra.mxu0 0.0
        %888 = vmatprep.subr.mxu0 0.0
        %889 = vmatpush1.msra.mxu0 0.0
        %890 = vmatprep.subr.mxu0 0.0
        %891 = vmatpush1.msra.mxu0 0.0
        %892 = vmatprep.subr.mxu0 0.0
        %893 = vmatpush1.msra.mxu0 0.0
        %894 = vmatprep.subr.mxu0 0.0
        %895 = vmatpush1.msra.mxu0 0.0
        %896 = vmatprep.subr.mxu0 0.0
        %897 = vmatpush1.msra.mxu0 0.0
        %898 = vmatprep.subr.mxu0 0.0
        %899 = vmatpush1.msra.mxu0 0.0
        %900 = vmatprep.subr.mxu0 0.0
        %901 = vmatpush1.msra.mxu0 0.0
        %902 = vmatprep.subr.mxu0 0.0
        %903 = vmatpush1.msra.mxu0 0.0
        %904 = vmatprep.subr.mxu0 0.0
        %905 = vmatpush1.msra.mxu0 0.0
        %906 = vmatprep.subr.mxu0 0.0
        %907 = vmatpush1.msra.mxu0 0.0
        %908 = vmatprep.subr.mxu0 0.0
        %909 = vmatpush1.msra.mxu0 0.0
        %910 = vmatprep.subr.mxu0 0.0
        %911 = vmatpush1.msra.mxu0 0.0
        %912 = vmatprep.subr.mxu0 0.0
        %913 = vmatpush1.msra.mxu0 0.0
        %914 = vmatprep.subr.mxu0 0.0
        %915 = vmatpush1.msra.mxu0 0.0
        %916 = vmatprep.subr.mxu0 0.0
        %917 = vmatpush1.msra.mxu0 0.0
        %918 = vmatprep.subr.mxu0 0.0
        %919 = vmatpush1.msra.mxu0 0.0
        %920 = vmatprep.subr.mxu0 0.0
        %921 = vmatpush1.msra.mxu0 0.0
        %922 = vmatprep.subr.mxu0 0.0
        %923 = vmatpush1.msra.mxu0 0.0
        %924 = vmatprep.subr.mxu0 0.0
        %925 = vmatpush1.msra.mxu0 0.0
        %926 = vmatprep.mubr.f32.mxu0 0.0
        %927 = vmatmul.mubr.f32.gmra.mrb[0].mxu0 %v860
        %v928 = vpop.f32.mrb[0].mxu0
        %v929 = vadd.f32 0.0, %v928
        %v930 = vpop.f32.mrb[0].mxu0
        %931 = vdwg.mxu0
        %v932 = vadd.f32 %v855, %v929
        %v933 = vmul.f32 %v700, %v700
        %v934 = vld [vmem:[%s3 + $0x190] sm:$0xff]
        %v935 = vld [vmem:[%s3 + $0x198] sm:$0xff]
        %v937 = vsel %vm858, %v933, 0
        %939 = vmatprep.subr.mxu0 0.0
        %940 = vmatpush1.msra.mxu0 %v934
        %941 = vmatprep.subr.mxu0 0.0
        %942 = vmatpush1.msra.mxu0 %v935
        %943 = vmatprep.subr.mxu0 0.0
        %944 = vmatpush1.msra.mxu0 0.0
        %945 = vmatprep.subr.mxu0 0.0
        %946 = vmatpush1.msra.mxu0 0.0
        %947 = vmatprep.subr.mxu0 0.0
        %948 = vmatpush1.msra.mxu0 0.0
        %949 = vmatprep.subr.mxu0 0.0
        %950 = vmatpush1.msra.mxu0 0.0
        %951 = vmatprep.subr.mxu0 0.0
        %952 = vmatpush1.msra.mxu0 0.0
        %953 = vmatprep.subr.mxu0 0.0
        %954 = vmatpush1.msra.mxu0 0.0
        %955 = vmatprep.subr.mxu0 0.0
        %956 = vmatpush1.msra.mxu0 0.0
        %957 = vmatprep.subr.mxu0 0.0
        %958 = vmatpush1.msra.mxu0 0.0
        %959 = vmatprep.subr.mxu0 0.0
        %960 = vmatpush1.msra.mxu0 0.0
        %961 = vmatprep.subr.mxu0 0.0
        %962 = vmatpush1.msra.mxu0 0.0
        %963 = vmatprep.subr.mxu0 0.0
        %964 = vmatpush1.msra.mxu0 0.0
        %965 = vmatprep.subr.mxu0 0.0
        %966 = vmatpush1.msra.mxu0 0.0
        %967 = vmatprep.subr.mxu0 0.0
        %968 = vmatpush1.msra.mxu0 0.0
        %969 = vmatprep.subr.mxu0 0.0
        %970 = vmatpush1.msra.mxu0 0.0
        %971 = vmatprep.subr.mxu0 0.0
        %972 = vmatpush1.msra.mxu0 0.0
        %973 = vmatprep.subr.mxu0 0.0
        %974 = vmatpush1.msra.mxu0 0.0
        %975 = vmatprep.subr.mxu0 0.0
        %976 = vmatpush1.msra.mxu0 0.0
        %977 = vmatprep.subr.mxu0 0.0
        %978 = vmatpush1.msra.mxu0 0.0
        %979 = vmatprep.subr.mxu0 0.0
        %980 = vmatpush1.msra.mxu0 0.0
        %981 = vmatprep.subr.mxu0 0.0
        %982 = vmatpush1.msra.mxu0 0.0
        %983 = vmatprep.subr.mxu0 0.0
        %984 = vmatpush1.msra.mxu0 0.0
        %985 = vmatprep.subr.mxu0 0.0
        %986 = vmatpush1.msra.mxu0 0.0
        %987 = vmatprep.subr.mxu0 0.0
        %988 = vmatpush1.msra.mxu0 0.0
        %989 = vmatprep.subr.mxu0 0.0
        %990 = vmatpush1.msra.mxu0 0.0
        %991 = vmatprep.subr.mxu0 0.0
        %992 = vmatpush1.msra.mxu0 0.0
        %993 = vmatprep.subr.mxu0 0.0
        %994 = vmatpush1.msra.mxu0 0.0
        %995 = vmatprep.subr.mxu0 0.0
        %996 = vmatpush1.msra.mxu0 0.0
        %997 = vmatprep.subr.mxu0 0.0
        %998 = vmatpush1.msra.mxu0 0.0
        %999 = vmatprep.subr.mxu0 0.0
        %1000 = vmatpush1.msra.mxu0 0.0
        %1001 = vmatprep.subr.mxu0 0.0
        %1002 = vmatpush1.msra.mxu0 0.0
        %1003 = vmatprep.mubr.f32.mxu0 0.0
        %1004 = vmatmul.mubr.f32.gmra.mrb[0].mxu0 %v937
        %v1005 = vpop.f32.mrb[0].mxu0
        %v1006 = vadd.f32 0.0, %v1005
        %v1007 = vpop.f32.mrb[0].mxu0
        %1008 = vdwg.mxu0
        %v1009 = vadd.f32 %v932, %v1006
        %v1010 = vlaneseq
        %v1011 = vshrl.u32 %v1010, 7
        %v1012 = vsub.s32 0, %v1011
        %v1013 = vrot.slane %v701, %v1012
        %v1014 = vadd.f32 %v1009, %v1013
        %v1015 = vtanh.pop %v1014
        %1016 = vst.msk [vmem:[#allocation2] sm:$0xff] %vm402, %v546
        %1018 = vrot.lane.b32.xlu0 %v1015, 32
        %v1019 = vpop.permute.xlu0 %1018
        %v1021 = vsel %vm402, %v546, %v1019
        %vm1022 = vcmask 392192
        %v1023 = vsel %vm1022, %v1021, 0.0
        %1024 = vst [vmem:[%s188] sm:$0xff] %v1023
        %s1025 = sand.u32 %s115, 1
        %s1026 = scalar_lea.sflag [#allocation4], %s1025
        %s1027 = sand.u32 %s115, 1
        %s1028 = smul.addr %s1027, 8
        %s1029 = scalar_lea.vmem [#allocation3], %s1028
        // Predicated region
        $region41: #{tpu_custom_call.1} parent=35 // pred_check
          %p1030 = pneg %p125
        $region42: #{tpu_custom_call.1} parent=35 // pred_check_branch
          %1032 = sbr.rel (%p1030) target = $region44
        $region43: #{tpu_custom_call.1} parent=35 // pred_region
          %s1034 = ssub.s32 128, 128
          %1035 = vsyncadd %s1026, %s1034
          %s1036 = smul.addr %s18, 128
          %s1037 = scalar_lea.hbm %s4, %s1036
          %s1039 = sshll.u32 %s1029, 4
          %s1040 = int_to_ptr.vmem [resolvable:$true] %s1039
          %1042 = dma.vmem_to_hbm [thread:$0]  %s1040, 128, %s1037, %s1026
        $region44: #{tpu_custom_call.1} parent=35 // pred_fallthru
          _
      $region36: #{tpu_custom_call.1} parent=5 // pred_fallthru
        _
      %p1043 = scmp.le.s32.totalorder 2, %s13
      // Predicated region
      $region45: #{tpu_custom_call.1} parent=5 // pred_check
        %p1044 = pneg %p1043
      $region46: #{tpu_custom_call.1} parent=5 // pred_check_branch
        %1046 = sbr.rel (%p1044) target = $region48
      $region47: #{tpu_custom_call.1} parent=5 // pred_region
        %s1047 = ssub.s32 %s13, 2
        // Predicated region
        $region49: #{tpu_custom_call.1} parent=47 // pred_check
          %p1048 = pneg %p131
        $region50: #{tpu_custom_call.1} parent=47 // pred_check_branch
          %1050 = sbr.rel (%p1048) target = $region52
        $region51: #{tpu_custom_call.1} parent=47 // pred_region
          %s1051 = sand.u32 %s116, 1
          %s1052 = scalar_lea.sflag [#allocation4], %s1051
          %s1053 = sand.u32 %s116, 1
          %s1054 = smul.addr %s1053, 8
          %s1055 = scalar_lea.vmem [#allocation3], %s1054
          %1056 = dma.done %s1052, 128
        $region52: #{tpu_custom_call.1} parent=47 // pred_fallthru
          _
      $region48: #{tpu_custom_call.1} parent=5 // pred_fallthru
        _
    $region6: #{tpu_custom_call.1} parent=1 // loop_footer
      %s17 = sadd.s32 1, %s13
    $region7: #{tpu_custom_call.1} parent=1 // loop_footer_branch
      %12 = sbr.rel target = $region3
    $region8: #{tpu_custom_call.1} parent=1 // loop_exit
      _
    %1057 = vsyncpa [#allocation4], 1
    %s1058 = scalar_lea.sflag [#allocation4], 1
    %1059 = vsyncpa %s1058, 1

</llo_original>
